<compile_context>
chip_gen: v6e
topology: v6e:2x2x1
jax: 0.10.0
libtpu: 0.0.40
codegen_flags: <defaults>
</compile_context>

<pallas_src>
import numpy as np
import jax
import jax.numpy as jnp
from jax.experimental import pallas as pl
from jax.experimental.pallas import tpu as pltpu


_BLOCK_ELEMS_F32 = 1 << 19   # ~2 MiB of f32 per output block (VMEM-safe on v5e/v6e/v7x)


# ----------------------------- Pallas kernel --------------------------------

def _drop_path_kernel(x_ref, s_ref, o_ref):
    # force_fp32 cast fused in-kernel; one row-broadcast VPU multiply.
    # x_ref: (bb, tm) native dtype, s_ref: (bb, 1) f32, o_ref: (bb, tm) f32.
    o_ref[...] = x_ref[...].astype(jnp.float32) * s_ref[...]


# ------------------------------- helpers -------------------------------------

def _round_up(v, m):
    return ((v + m - 1) // m) * m


def _choose_blocks(bp, mp):
    """bp: padded batch (mult of 8), mp: padded feature (mult of 128)."""
    # lane-dense feature tile, bounded so an 8-row block stays within budget
    tm = min(mp, max(128, (_BLOCK_ELEMS_F32 // 8) // 128 * 128))
    # batch block: multiples of 8 rows, fill remaining budget (fewer grid steps)
    bb = min(bp, max(8, (_BLOCK_ELEMS_F32 // tm) // 8 * 8))
    # keep >= 2 steps on a parallel axis when possible (v7x has 2 TensorCores)
    if bp // bb < 2 and mp // tm < 2:
        if mp >= 256:
            tm = max(128, _round_up(mp // 2, 128))
        elif bp >= 16:
            bb = max(8, _round_up(bp // 2, 8))
    return bb, tm


def _per_sample_scale(key, batch, keep_prob):
    """torch: floor(keep_prob + U) / keep_prob, U ~ Uniform[0,1).  Shape (B, 1) f32."""
    u = jax.random.uniform(key, (batch, 1), dtype=jnp.float32)
    keep = jnp.floor(keep_prob + u)            # 1 w.p. keep_prob, else 0
    return keep * (1.0 / keep_prob)            # 0 or 1/keep_prob


# ------------------------------- wrapper --------------------------------------

def _drop_path_pallas(x2d, scale_col):
    """x2d: (B, M) any float dtype; scale_col: (B, 1) f32.  Returns (B, M) f32."""
    b, m = x2d.shape
    bp = _round_up(max(b, 1), 8)
    mp = _round_up(max(m, 1), 128)
    if (bp, mp) != (b, m):
        x2d = jnp.pad(x2d, ((0, bp - b), (0, mp - m)))
        scale_col = jnp.pad(scale_col, ((0, bp - b), (0, 0)))

    bb, tm = _choose_blocks(bp, mp)
    grid = (pl.cdiv(bp, bb), pl.cdiv(mp, tm))

    out = pl.pallas_call(
        _drop_path_kernel,
        out_shape=jax.ShapeDtypeStruct((bp, mp), jnp.float32),
        grid=grid,
        in_specs=[pl.BlockSpec((bb, tm), lambda bi, fi: (bi, fi)),
                  pl.BlockSpec((bb, 1), lambda bi, fi: (bi, 0))],
        out_specs=pl.BlockSpec((bb, tm), lambda bi, fi: (bi, fi)),
        compiler_params=pltpu.CompilerParams(
            dimension_semantics=("parallel", "parallel")),
    )(x2d, scale_col)

    if (bp, mp) != (b, m):
        out = out[:b, :m]
    return out


def drop_path_forward(x, drop_prob=0.0, training=False, key=None):
    """Pallas equivalent of DropPath.forward (force_fp32 applied to x).

    NOTE: pass a fresh `key` per call/layer/step for correct stochastic-depth
    statistics (a fixed key reproduces the same drop mask every invocation).
    `drop_prob` / `training` must be static Python values (as in the module).
    """
    if drop_prob == 0.0 or not training:
        return x.astype(jnp.float32)           # identity, like the PyTorch early return
    keep_prob = 1.0 - float(drop_prob)
    if key is None:
        key = jax.random.PRNGKey(0)
    batch = x.shape[0]
    m = int(np.prod(x.shape[1:])) if x.ndim > 1 else 1
    scale = _per_sample_scale(key, batch, keep_prob)
    out2d = _drop_path_pallas(x.reshape(batch, m), scale)
    return out2d.reshape(x.shape)


# ---------------------------------- main ---------------------------------------

if __name__ == "__main__":
    B, N, C = 8, 16, 128          # flattens to a lane-dense (8, 2048) f32 slab
    drop_prob = 0.25
    keep_prob = 1.0 - drop_prob

    xkey, mkey = jax.random.split(jax.random.PRNGKey(0))
    x = jax.random.normal(xkey, (B, N, C), dtype=jnp.float32)
    x_np = np.asarray(x)

    # --- training mode ---
    y = drop_path_forward(x, drop_prob, training=True, key=mkey)
    y = np.asarray(jax.block_until_ready(y))

    # reference: same per-sample mask recomputed from the same key
    scale = np.asarray(_per_sample_scale(mkey, B, keep_prob)).reshape(B)
    mask = scale * keep_prob
    assert np.all(np.isclose(mask, 0.0, atol=1e-6) | np.isclose(mask, 1.0, atol=1e-6)), mask
    ref = x_np / keep_prob * mask[:, None, None]
    assert y.shape == x.shape and y.dtype == np.float32
    assert np.allclose(y, ref, atol=1e-6, rtol=1e-6)
    for b in range(B):
        if mask[b] < 0.5:
            assert np.allclose(y[b], 0.0, atol=1e-6)
        else:
            assert np.allclose(y[b], x_np[b] / keep_prob, atol=1e-6, rtol=1e-6)

    # fused force_fp32: bf16 input -> f32 output, same realized mask
    y_bf16 = np.asarray(jax.block_until_ready(
        drop_path_forward(x.astype(jnp.bfloat16), drop_prob, training=True, key=mkey)))
    assert y_bf16.dtype == np.float32
    assert np.allclose(y_bf16, ref, atol=2e-2, rtol=2e-2)

    # non-8/128-multiple shape exercises the wrapper padding + cdiv tiling path
    x_odd = jax.random.normal(jax.random.PRNGKey(3), (5, 7, 33), dtype=jnp.float32)
    y_odd = np.asarray(jax.block_until_ready(
        drop_path_forward(x_odd, drop_prob, training=True, key=mkey)))
    scale_odd = np.asarray(_per_sample_scale(mkey, 5, keep_prob)).reshape(5)
    assert np.allclose(y_odd, np.asarray(x_odd) * scale_odd[:, None, None],
                       atol=1e-6, rtol=1e-6)

    # --- eval mode / drop_prob == 0: identity ---
    y_eval = np.asarray(drop_path_forward(x, drop_prob, training=False))
    y_p0 = np.asarray(drop_path_forward(x, 0.0, training=True))
    assert np.allclose(y_eval, x_np) and np.allclose(y_p0, x_np)

    print("KERNEL_OK")
</pallas_src>

<mosaic_0001>
module attributes {stable_mosaic.version = 11 : i64} {
  func.func @_drop_path_kernel(%arg0: i32, %arg1: i32, %arg2: memref<8x1024xf32, #tpu.memory_space<vmem>>, %arg3: memref<8x1xf32, #tpu.memory_space<vmem>>, %arg4: memref<8x1024xf32, #tpu.memory_space<vmem>>) attributes {dimension_semantics = [#tpu.dimension_semantics<parallel>, #tpu.dimension_semantics<parallel>], iteration_bounds = array<i64: 1, 2>, scalar_prefetch = 0 : i64, scratch_operands = 0 : i64, tpu.core_type = #tpu.core_type<tc>, window_params = [{transform_indices = @transform_0, window_bounds = array<i64: 8, 1024>}, {transform_indices = @transform_1, window_bounds = array<i64: 8, 1>}, {transform_indices = @transform_2, window_bounds = array<i64: 8, 1024>}]} {
    %c0 = arith.constant 0 : index
    %c0_0 = arith.constant 0 : index
    %0 = vector.load %arg2[%c0, %c0_0] : memref<8x1024xf32, #tpu.memory_space<vmem>>, vector<8x1024xf32>
    %c0_1 = arith.constant 0 : index
    %c0_2 = arith.constant 0 : index
    %1 = vector.load %arg3[%c0_1, %c0_2] : memref<8x1xf32, #tpu.memory_space<vmem>>, vector<8x1xf32>
    %2 = vector.broadcast %1 : vector<8x1xf32> to vector<8x1024xf32>
    %3 = arith.mulf %0, %2 : vector<8x1024xf32>
    %c0_3 = arith.constant 0 : index
    %c0_4 = arith.constant 0 : index
    %4 = vector.load %arg4[%c0_3, %c0_4] : memref<8x1024xf32, #tpu.memory_space<vmem>>, vector<8x1024xf32>
    tpu.vector_store %arg4[%c0_3, %c0_4], %3 {strides = array<i32>} : memref<8x1024xf32, #tpu.memory_space<vmem>>, vector<8x1024xf32>,
    return
  }
  func.func @transform_0(%arg0: i32, %arg1: i32) -> (i32, i32) {
    %c0_i32 = arith.constant 0 : i32
    return %arg0, %arg1 : i32, i32
  }
  func.func @transform_1(%arg0: i32, %arg1: i32) -> (i32, i32) {
    %c0_i32 = arith.constant 0 : i32
    %c0_i32_0 = arith.constant 0 : i32
    return %arg0, %c0_i32 : i32, i32
  }
  func.func @transform_2(%arg0: i32, %arg1: i32) -> (i32, i32) {
    %c0_i32 = arith.constant 0 : i32
    return %arg0, %arg1 : i32, i32
  }
}

</mosaic_0001>

<llo_original>
// kernel: tpu_custom_call.1
$region0: #{tpu_custom_call.1}
  #allocation0 [shape = 'u32[]', space=smem, size = 0x4, offset = 0x4, fixed_abs, tag = 'smem constant byte address 0x4 - core index']
  #allocation1 [shape = 'u32[144,128]{1,0:T(1,128)}', space=vmem, size = 0x12000, scoped, tag = 'internal scratch']
  %s0 = inlined_call_operand.hbm [shape: f32[8,2048], index: 0, kind: input, shape index: {}]
  %s1 = inlined_call_operand.vmem [shape: f32[8,1], index: 1, kind: input, shape index: {}]
  %s2 = inlined_call_operand.hbm [shape: f32[8,2048], index: 2, kind: output, shape index: {}]
  %s3 = sld [smem:[#allocation0]]
  $region45: #{tpu_custom_call.1} parent=0
    _
  %s5 = ssub.s32 1, %s3
  %s6 = scalar_select 0, %s5, %s3
  $region1: #{tpu_custom_call.1} parent=0
    #allocation2 [shape = 'u8[65536]{0}', space=vmem, size = 0x10000, scoped, tag = 'input window, operand 0']
    #allocation3 [shape = 's32[2]{0}', space=sflag, size = 0x8, scoped, tag = 'scoped memory for tpu_custom_call.1']
    #allocation4 [shape = 's32[2]{0}', space=sflag, size = 0x8, scoped, tag = 'scoped memory for tpu_custom_call.1']
    #allocation5 [shape = 'u8[65536]{0}', space=vmem, size = 0x10000, scoped, tag = 'output window, operand 0']
    %7 = vsyncpa [#allocation3], 0
    %s8 = scalar_lea.sflag [#allocation3], 1
    %9 = vsyncpa %s8, 0
    %10 = vsyncpa [#allocation4], 0
    %s11 = scalar_lea.sflag [#allocation4], 1
    %12 = vsyncpa %s11, 0
    loop: start=0, step=1, limit=4
    $region2: #{tpu_custom_call.1} parent=1 // loop_pre_header
      _
    $region3: #{tpu_custom_call.1} parent=1 // loop_header
      %s14 = sphi 0, %s18
      %p15 = scmp.ge.s32.totalorder %s14, 4
      %s21 = sphi 0, %s33
      %s22 = sphi 0, %s29
      %s23 = sphi 0, %s21
      %s24 = sphi 0, %s22
      %s25 = sphi 0, %s23
      %s26 = sphi 0, %s24
      %s38 = sphi 0, %s40
      %s41 = sphi 0, %s38
      %s42 = sphi 0, %s41
      %s58 = sphi 0, %s42
      %s64 = sphi 0, %s66
      %s67 = sphi 0, %s64
      %s68 = sphi 0, %s67
      %s84 = sphi 0, %s68
      %s92 = sphi 0, %s94
      %s95 = sphi 0, %s92
      %s96 = sphi 0, %s95
      %s112 = sphi 0, %s96
    $region4: #{tpu_custom_call.1} parent=1 // loop_header_branch
      %17 = sbr.rel (%p15) target = $region8
    $region5: #{tpu_custom_call.1} parent=1 // loop_body
      %s19 = ssub.s32 %s14, 1
      %s20 = ssub.s32 %s14, 2
      %s27 = sadd.s32 1, %s22
      %p28 = scmp.ge.s32.totalorder %s27, 2
      %s29 = scalar_select %p28, 0, %s27
      %s30 = sadd.s32 1, %s21
      %s31 = scalar_select %p28, %s30, %s21
      %p32 = scmp.ge.s32.totalorder %s31, 1
      %s33 = scalar_select %p32, 0, %s31
      %s34 = ssub.s32 %s21, %s33
      %s35 = ssub.s32 %s22, %s29
      %s36 = sor.u32 %s34, %s35
      %p37 = scmp.eq.s32.totalorder %s36, 0
      %s39 = sadd.s32 %s38, 1
      %s40 = scalar_select %p37, %s38, %s39
      %p43 = pneg %p37
      %p44 = scmp.eq.s32.totalorder %s14, 1
      %p45 = por %p43, %p44
      %p46 = scmp.ne.s32.totalorder %s38, %s41
      %p47 = scmp.eq.s32.totalorder %s14, 0
      %p48 = por %p46, %p47
      %p49 = scmp.ne.s32.totalorder %s38, %s41
      %p50 = scmp.eq.s32.totalorder %s19, 1
      %p51 = por %p49, %p50
      %p52 = scmp.ne.s32.totalorder %s41, %s42
      %p53 = scmp.eq.s32.totalorder %s19, 0
      %p54 = por %p52, %p53
      %p55 = scmp.ne.s32.totalorder %s41, %s42
      %p56 = scmp.eq.s32.totalorder %s20, 1
      %p57 = por %p55, %p56
      %p59 = scmp.ne.s32.totalorder %s42, %s58
      %p60 = scmp.eq.s32.totalorder %s20, 0
      %p61 = por %p59, %p60
      %s62 = ssub.s32 %s21, %s33
      %p63 = scmp.eq.s32.totalorder %s62, 0
      %s65 = sadd.s32 %s64, 1
      %s66 = scalar_select %p63, %s64, %s65
      %p69 = pneg %p63
      %p70 = scmp.eq.s32.totalorder %s14, 1
      %p71 = por %p69, %p70
      %p72 = scmp.ne.s32.totalorder %s64, %s67
      %p73 = scmp.eq.s32.totalorder %s14, 0
      %p74 = por %p72, %p73
      %p75 = scmp.ne.s32.totalorder %s64, %s67
      %p76 = scmp.eq.s32.totalorder %s19, 1
      %p77 = por %p75, %p76
      %p78 = scmp.ne.s32.totalorder %s67, %s68
      %p79 = scmp.eq.s32.totalorder %s19, 0
      %p80 = por %p78, %p79
      %p81 = scmp.ne.s32.totalorder %s67, %s68
      %p82 = scmp.eq.s32.totalorder %s20, 1
      %p83 = por %p81, %p82
      %p85 = scmp.ne.s32.totalorder %s68, %s84
      %p86 = scmp.eq.s32.totalorder %s20, 0
      %p87 = por %p85, %p86
      %s88 = ssub.s32 %s21, %s33
      %s89 = ssub.s32 %s22, %s29
      %s90 = sor.u32 %s88, %s89
      %p91 = scmp.eq.s32.totalorder %s90, 0
      %s93 = sadd.s32 %s92, 1
      %s94 = scalar_select %p91, %s92, %s93
      %p97 = pneg %p91
      %p98 = scmp.eq.s32.totalorder %s14, 1
      %p99 = por %p97, %p98
      %p100 = scmp.ne.s32.totalorder %s92, %s95
      %p101 = scmp.eq.s32.totalorder %s14, 0
      %p102 = por %p100, %p101
      %p103 = scmp.ne.s32.totalorder %s92, %s95
      %p104 = scmp.eq.s32.totalorder %s19, 1
      %p105 = por %p103, %p104
      %p106 = scmp.ne.s32.totalorder %s95, %s96
      %p107 = scmp.eq.s32.totalorder %s19, 0
      %p108 = por %p106, %p107
      %p109 = scmp.ne.s32.totalorder %s95, %s96
      %p110 = scmp.eq.s32.totalorder %s20, 1
      %p111 = por %p109, %p110
      %p113 = scmp.ne.s32.totalorder %s96, %s112
      %p114 = scmp.eq.s32.totalorder %s20, 0
      %p115 = por %p113, %p114
      %p116 = scmp.le.s32.totalorder 1, %s14
      %p117 = scmp.lt.s32.totalorder %s14, 3
      %p118 = pnand %p116, %p117
      %p119 = pneg %p118
      // Predicated region
      $region9: #{tpu_custom_call.1} parent=5 // pred_check
        _
      $region10: #{tpu_custom_call.1} parent=5 // pred_check_branch
        %121 = sbr.rel (%p118) target = $region12
      $region11: #{tpu_custom_call.1} parent=5 // pred_region
        %s122 = ssub.s32 %s14, 1
        // Predicated region
        $region13: #{tpu_custom_call.1} parent=11 // pred_check
          %p123 = pneg %p80
        $region14: #{tpu_custom_call.1} parent=11 // pred_check_branch
          %125 = sbr.rel (%p123) target = $region16
        $region15: #{tpu_custom_call.1} parent=11 // pred_region
          %p126 = scmp.lt.s32.totalorder %s23, 0
          %s127 = scalar_select %p126, %s23, 0
          %s128 = smul.addr %s127, 8
          %s129 = scalar_lea.vmem %s1, %s128
        $region16: #{tpu_custom_call.1} parent=11 // pred_fallthru
          _
      $region12: #{tpu_custom_call.1} parent=5 // pred_fallthru
        _
      %p130 = scmp.lt.s32.totalorder %s14, 2
      // Predicated region
      $region17: #{tpu_custom_call.1} parent=5 // pred_check
        %p131 = pneg %p130
      $region18: #{tpu_custom_call.1} parent=5 // pred_check_branch
        %133 = sbr.rel (%p131) target = $region20
      $region19: #{tpu_custom_call.1} parent=5 // pred_region
        // Predicated region
        $region21: #{tpu_custom_call.1} parent=19 // pred_check
          %p134 = pneg %p48
        $region22: #{tpu_custom_call.1} parent=19 // pred_check_branch
          %136 = sbr.rel (%p134) target = $region24
        $region23: #{tpu_custom_call.1} parent=19 // pred_region
          %s137 = sand.u32 %s38, 1
          %s138 = scalar_lea.sflag [#allocation3], %s137
          %s139 = sand.u32 %s38, 1
          %s140 = smul.addr %s139, 64
          %s141 = scalar_lea.vmem [#allocation2], %s140
          %s142 = smul.u32 8, %s22
          %s144 = ssub.s32 1024, 1024
          %145 = vsyncadd %s138, %s144
          %s146 = smul.addr %s21, 16
          %s147 = sadd.s32 %s142, %s146
          %s148 = smul.addr %s147, 128
          %s149 = scalar_lea.hbm %s0, %s148
          %s151 = sshll.u32 %s141, 4
          %s152 = int_to_ptr.vmem [resolvable:$true] %s151
          %154 = dma.hbm_to_vmem [thread:$0]  %s149, 1024, %s152, %s138
        $region24: #{tpu_custom_call.1} parent=19 // pred_fallthru
          _
      $region20: #{tpu_custom_call.1} parent=5 // pred_fallthru
        _
      %p155 = scmp.le.s32.totalorder 1, %s14
      %p156 = scmp.lt.s32.totalorder %s14, 3
      %p157 = pnand %p155, %p156
      %p158 = pneg %p157
      // Predicated region
      $region25: #{tpu_custom_call.1} parent=5 // pred_check
        _
      $region26: #{tpu_custom_call.1} parent=5 // pred_check_branch
        %160 = sbr.rel (%p157) target = $region28
      $region27: #{tpu_custom_call.1} parent=5 // pred_region
        %s161 = ssub.s32 %s14, 1
        %s162 = sand.u32 %s41, 1
        %s163 = scalar_lea.sflag [#allocation3], %s162
        %s164 = sand.u32 %s41, 1
        %s165 = smul.addr %s164, 64
        %s166 = scalar_lea.vmem [#allocation2], %s165
        // Predicated region
        $region29: #{tpu_custom_call.1} parent=27 // pred_check
          %p167 = pneg %p54
        $region30: #{tpu_custom_call.1} parent=27 // pred_check_branch
          %169 = sbr.rel (%p167) target = $region32
        $region31: #{tpu_custom_call.1} parent=27 // pred_region
          %170 = dma.done %s163, 1024
        $region32: #{tpu_custom_call.1} parent=27 // pred_fallthru
          _
        %s171 = sand.u32 %s41, 1
        %s172 = scalar_lea.sflag [#allocation3], %s171
        %s173 = sand.u32 %s41, 1
        %s174 = smul.addr %s173, 64
        %s175 = scalar_lea.vmem [#allocation2], %s174
        %p176 = pneg %p54
        %p177 = pneg %p51
        %p178 = scmp.lt.s32.totalorder %s23, 0
        %s179 = scalar_select %p178, %s23, 0
        %s180 = smul.addr %s179, 8
        %s181 = scalar_lea.vmem %s1, %s180
        %p182 = pneg %p80
        %p183 = pneg %p77
        %p184 = pneg %p108
        %p185 = pneg %p105
        %s186 = sand.u32 %s95, 1
        %s187 = scalar_lea.sflag [#allocation4], %s186
        %s188 = sand.u32 %s95, 1
        %s189 = smul.addr %s188, 64
        %s190 = scalar_lea.vmem [#allocation5], %s189
        %s191 = smul.u32 8, %s24
        %p192 = scmp.lt.s32.totalorder %s23, 0
        %s193 = scalar_select %p192, %s23, 0
        %s194 = smul.addr %s193, 8
        %s195 = scalar_lea.vmem %s1, %s194
        %s196 = smul.u32 8, %s24
        %v197 = vld [vmem:[%s166] sm:$0xff]
        %v198 = vld [vmem:[%s166 + $0x8] sm:$0xff]
        %v199 = vld [vmem:[%s166 + $0x10] sm:$0xff]
        %v200 = vld [vmem:[%s166 + $0x18] sm:$0xff]
        %v201 = vld [vmem:[%s166 + $0x20] sm:$0xff]
        %v202 = vld [vmem:[%s166 + $0x28] sm:$0xff]
        %v203 = vld [vmem:[%s166 + $0x30] sm:$0xff]
        %v204 = vld [vmem:[%s166 + $0x38] sm:$0xff]
        %v205 = vld [vmem:[%s195] sm:$0xff]
        %207 = vset.pattern.permute.xlu0 0
        %208 = vperm.xlu0 %207, %v205
        %v209 = vpop.permute.xlu0 %208
        %v211 = vmul.f32 %v197, %v209
        %v212 = vmul.f32 %v198, %v209
        %v213 = vmul.f32 %v199, %v209
        %v214 = vmul.f32 %v200, %v209
        %v215 = vmul.f32 %v201, %v209
        %v216 = vmul.f32 %v202, %v209
        %v217 = vmul.f32 %v203, %v209
        %v218 = vmul.f32 %v204, %v209
        %219 = vst [vmem:[%s190] sm:$0xff] %v211
        %220 = vst [vmem:[%s190 + $0x8] sm:$0xff] %v212
        %221 = vst [vmem:[%s190 + $0x10] sm:$0xff] %v213
        %222 = vst [vmem:[%s190 + $0x18] sm:$0xff] %v214
        %223 = vst [vmem:[%s190 + $0x20] sm:$0xff] %v215
        %224 = vst [vmem:[%s190 + $0x28] sm:$0xff] %v216
        %225 = vst [vmem:[%s190 + $0x30] sm:$0xff] %v217
        %226 = vst [vmem:[%s190 + $0x38] sm:$0xff] %v218
        %s227 = sand.u32 %s95, 1
        %s228 = scalar_lea.sflag [#allocation4], %s227
        %s229 = sand.u32 %s95, 1
        %s230 = smul.addr %s229, 64
        %s231 = scalar_lea.vmem [#allocation5], %s230
        // Predicated region
        $region33: #{tpu_custom_call.1} parent=27 // pred_check
          %p232 = pneg %p105
        $region34: #{tpu_custom_call.1} parent=27 // pred_check_branch
          %234 = sbr.rel (%p232) target = $region36
        $region35: #{tpu_custom_call.1} parent=27 // pred_region
          %s235 = smul.u32 8, %s24
          %s237 = ssub.s32 1024, 1024
          %238 = vsyncadd %s228, %s237
          %s239 = smul.addr %s23, 16
          %s240 = sadd.s32 %s235, %s239
          %s241 = smul.addr %s240, 128
          %s242 = scalar_lea.hbm %s2, %s241
          %s244 = sshll.u32 %s231, 4
          %s245 = int_to_ptr.vmem [resolvable:$true] %s244
          %247 = dma.vmem_to_hbm [thread:$0]  %s245, 1024, %s242, %s228
        $region36: #{tpu_custom_call.1} parent=27 // pred_fallthru
          _
      $region28: #{tpu_custom_call.1} parent=5 // pred_fallthru
        _
      %p248 = scmp.le.s32.totalorder 2, %s14
      // Predicated region
      $region37: #{tpu_custom_call.1} parent=5 // pred_check
        %p249 = pneg %p248
      $region38: #{tpu_custom_call.1} parent=5 // pred_check_branch
        %251 = sbr.rel (%p249) target = $region40
      $region39: #{tpu_custom_call.1} parent=5 // pred_region
        %s252 = ssub.s32 %s14, 2
        // Predicated region
        $region41: #{tpu_custom_call.1} parent=39 // pred_check
          %p253 = pneg %p111
        $region42: #{tpu_custom_call.1} parent=39 // pred_check_branch
          %255 = sbr.rel (%p253) target = $region44
        $region43: #{tpu_custom_call.1} parent=39 // pred_region
          %s256 = sand.u32 %s96, 1
          %s257 = scalar_lea.sflag [#allocation4], %s256
          %s258 = sand.u32 %s96, 1
          %s259 = smul.addr %s258, 64
          %s260 = scalar_lea.vmem [#allocation5], %s259
          %261 = dma.done %s257, 1024
        $region44: #{tpu_custom_call.1} parent=39 // pred_fallthru
          _
      $region40: #{tpu_custom_call.1} parent=5 // pred_fallthru
        _
    $region6: #{tpu_custom_call.1} parent=1 // loop_footer
      %s18 = sadd.s32 1, %s14
    $region7: #{tpu_custom_call.1} parent=1 // loop_footer_branch
      %13 = sbr.rel target = $region3
    $region8: #{tpu_custom_call.1} parent=1 // loop_exit
      _
    %262 = vsyncpa [#allocation3], 1
    %s263 = scalar_lea.sflag [#allocation3], 1
    %264 = vsyncpa %s263, 1
    %265 = vsyncpa [#allocation4], 1
    %s266 = scalar_lea.sflag [#allocation4], 1
    %267 = vsyncpa %s266, 1

</llo_original>
